<compile_context>
chip_gen: v5e
topology: v5e:2x2
jax: 0.10.0
libtpu: 0.0.40
codegen_flags: <defaults>
</compile_context>

<pallas_src>
import jax
import jax.numpy as jnp
from jax.experimental import pallas as pl
from jax.experimental.pallas import tpu as pltpu

_MIB = 1 << 20


def _pixel_preprocess_kernel(x_ref, o_ref):
    # Cast-in-kernel (uint8 -> f32 on the VPU), x/255 - 0.5, cast at the store.
    x = x_ref[...].astype(jnp.float32)
    o_ref[...] = (x * (1.0 / 255.0) - 0.5).astype(o_ref.dtype)


def _vmem_capacity_bytes() -> int:
    """Physical VMEM bytes for this chip; conservative 64 MiB (v7x) fallback."""
    try:
        info_fn = getattr(pltpu, "get_tpu_info", None)
        if info_fn is not None:
            cap = getattr(info_fn(), "vmem_capacity_bytes", None)
            if cap:
                return int(cap)
    except Exception:
        pass
    return 64 * _MIB  # v7x value; v5e/v6e have 128 MiB, so this is always safe.


def _lane_dense_flatten(n: int):
    """(rows, cols) with cols a large multiple of 128 dividing n, else None."""
    for lanes in (8192, 4096, 2048, 1024, 512, 256, 128):
        if n % lanes == 0:
            return n // lanes, lanes
    return None


def _choose_tiles(rows: int, cols: int, in_isz: int, out_isz: int,
                  budget_bytes: int):
    """Pick (row_tile, col_tile) so one step's in+out tiles fit the budget."""
    per_elem = in_isz + out_isz
    # Column tile: keep the full width unless even an 8-row slab blows the
    # budget (only happens for extremely wide fallback layouts / 1-D inputs).
    if 8 * cols * per_elem <= budget_bytes or cols <= 512:
        tc = cols
    else:
        tc = (budget_bytes // (8 * per_elem) // 512) * 512
        tc = max(512, min(tc, cols))
    per_row = tc * per_elem
    tr = budget_bytes // max(1, per_row)
    if tr >= rows:
        tr = rows                      # full extent: always a legal block shape
    elif tr >= 32:
        tr = (tr // 32) * 32           # nice sublane alignment incl. u8 packing
    elif tr >= 8:
        tr = (tr // 8) * 8             # minimum legal sublane alignment
    else:
        tr = min(8, rows)              # floor; vmem_limit below is sized for it
    return int(tr), int(tc)


def pixel_preprocess(x: jax.Array, out_dtype=jnp.float32, use_pallas=None,
                     core_parallel: bool = False) -> jax.Array:
    """Normalizes pixel observations to [-0.5, 0.5] (x / 255 - 0.5).

    Accepts any shape / dtype (uint8 raw pixels preferred: least HBM traffic).
    Returns the same shape with dtype `out_dtype` (default f32, matching the
    PyTorch float semantics; pass jnp.bfloat16 to halve write traffic).
    """
    orig_shape = x.shape

    if use_pallas is None:
        # For small inputs a standalone pallas_call forces an HBM round-trip
        # that XLA would otherwise fuse into the consumer; skip Pallas there.
        use_pallas = x.size >= (1 << 18)

    if not use_pallas:
        return (x.astype(jnp.float32) * (1.0 / 255.0) - 0.5).astype(out_dtype)

    # --- Flatten to a lane-dense 2-D layout (elementwise => layout is free). --
    n = int(x.size)
    flat = _lane_dense_flatten(n)
    if flat is not None:
        rows, cols = flat
    elif x.ndim >= 2:
        rows = 1
        for d in orig_shape[:-2]:
            rows *= int(d)
        cols = int(orig_shape[-2]) * int(orig_shape[-1])
    else:
        rows, cols = 1, n
    x2d = x.reshape(rows, cols)

    in_isz = x2d.dtype.itemsize
    out_isz = jnp.dtype(out_dtype).itemsize

    # --- Generation-aware per-step budget + matching VMEM limit. -------------
    vmem_cap = _vmem_capacity_bytes()
    budget = min(16 * _MIB, vmem_cap // 5)     # v7x ~12.8 MiB, v5e/v6e 16 MiB
    tr, tc = _choose_tiles(rows, cols, in_isz, out_isz, budget)
    step_bytes = tr * tc * (in_isz + out_isz)
    vmem_limit = int(min(int(0.75 * vmem_cap),
                         max(32 * _MIB, 2 * step_bytes + 4 * _MIB)))

    row_sem = pltpu.CORE_PARALLEL if core_parallel else "parallel"

    out2d = pl.pallas_call(
        _pixel_preprocess_kernel,
        out_shape=jax.ShapeDtypeStruct((rows, cols), out_dtype),
        grid=(pl.cdiv(rows, tr), pl.cdiv(cols, tc)),
        in_specs=[pl.BlockSpec((tr, tc), lambda i, j: (i, j))],
        out_specs=pl.BlockSpec((tr, tc), lambda i, j: (i, j)),
        compiler_params=pltpu.CompilerParams(
            dimension_semantics=(row_sem, "arbitrary"),
            vmem_limit_bytes=vmem_limit,
        ),
    )(x2d)

    return out2d.reshape(orig_shape)


if __name__ == "__main__":
    key = jax.random.PRNGKey(0)
    k1, k2, k3 = jax.random.split(key, 3)

    # Case 1: float32 NCHW observation batch (PyTorch float in-place semantics):
    # B=2, C=4 (frame-stacked), 16x16. Exercises the lane-dense flatten path.
    x_f32 = jax.random.randint(k1, (2, 4, 16, 16), 0, 256).astype(jnp.float32)
    out_f32 = jax.block_until_ready(pixel_preprocess(x_f32, use_pallas=True))
    ref_f32 = x_f32 / 255.0 - 0.5
    assert out_f32.shape == x_f32.shape and out_f32.dtype == jnp.float32
    assert float(jnp.max(jnp.abs(out_f32 - ref_f32))) < 1e-6
    assert float(jnp.min(out_f32)) >= -0.5 - 1e-6
    assert float(jnp.max(out_f32)) <= 0.5 + 1e-6

    # Case 2: raw uint8 pixels — the low-traffic path (cast happens in-kernel).
    x_u8 = jax.random.randint(k2, (8, 12, 24, 24), 0, 256, dtype=jnp.int32)
    x_u8 = x_u8.astype(jnp.uint8)
    out_u8 = jax.block_until_ready(pixel_preprocess(x_u8, use_pallas=True))
    ref_u8 = x_u8.astype(jnp.float32) / 255.0 - 0.5
    assert out_u8.shape == x_u8.shape and out_u8.dtype == jnp.float32
    assert float(jnp.max(jnp.abs(out_u8 - ref_u8))) < 1e-6

    # Case 3: uint8 -> bf16 output (halved write traffic); 84x84 is not a
    # multiple of 128, so this exercises the non-lane-dense fallback layout.
    x3 = jax.random.randint(k3, (4, 3, 84, 84), 0, 256, dtype=jnp.int32)
    x3 = x3.astype(jnp.uint8)
    out_bf16 = jax.block_until_ready(
        pixel_preprocess(x3, out_dtype=jnp.bfloat16, use_pallas=True))
    ref3 = x3.astype(jnp.float32) / 255.0 - 0.5
    assert out_bf16.shape == x3.shape and out_bf16.dtype == jnp.bfloat16
    assert float(jnp.max(jnp.abs(out_bf16.astype(jnp.float32) - ref3))) < 4e-3

    print("KERNEL_OK")
</pallas_src>

<mosaic_0001>
module attributes {stable_mosaic.version = 11 : i64} {
  func.func @_pixel_preprocess_kernel(%arg0: i32, %arg1: i32, %arg2: memref<1x2048xf32, #tpu.memory_space<vmem>>, %arg3: memref<1x2048xf32, #tpu.memory_space<vmem>>) attributes {dimension_semantics = [#tpu.dimension_semantics<parallel>, #tpu.dimension_semantics<arbitrary>], iteration_bounds = array<i64: 1, 1>, scalar_prefetch = 0 : i64, scratch_operands = 0 : i64, tpu.core_type = #tpu.core_type<tc>, window_params = [{transform_indices = @transform_0, window_bounds = array<i64: 1, 2048>}, {transform_indices = @transform_1, window_bounds = array<i64: 1, 2048>}]} {
    %c0 = arith.constant 0 : index
    %c0_0 = arith.constant 0 : index
    %0 = vector.load %arg2[%c0, %c0_0] : memref<1x2048xf32, #tpu.memory_space<vmem>>, vector<1x2048xf32>
    %cst = arith.constant 0.00392156886 : f32
    %1 = vector.broadcast %cst : f32 to vector<1x2048xf32>
    %2 = arith.mulf %0, %1 : vector<1x2048xf32>
    %cst_1 = arith.constant 5.000000e-01 : f32
    %3 = vector.broadcast %cst_1 : f32 to vector<1x2048xf32>
    %4 = arith.subf %2, %3 : vector<1x2048xf32>
    %c0_2 = arith.constant 0 : index
    %c0_3 = arith.constant 0 : index
    %5 = vector.load %arg3[%c0_2, %c0_3] : memref<1x2048xf32, #tpu.memory_space<vmem>>, vector<1x2048xf32>
    tpu.vector_store %arg3[%c0_2, %c0_3], %4 {strides = array<i32>} : memref<1x2048xf32, #tpu.memory_space<vmem>>, vector<1x2048xf32>,
    return
  }
  func.func @transform_0(%arg0: i32, %arg1: i32) -> (i32, i32) {
    %c0_i32 = arith.constant 0 : i32
    return %arg0, %arg1 : i32, i32
  }
  func.func @transform_1(%arg0: i32, %arg1: i32) -> (i32, i32) {
    %c0_i32 = arith.constant 0 : i32
    return %arg0, %arg1 : i32, i32
  }
}

</mosaic_0001>

<llo_original>
// kernel: tpu_custom_call.1
$region0: #{tpu_custom_call.1}
  #allocation0 [shape = 'u32[]', space=smem, size = 0x4, offset = 0x4, fixed_abs, tag = 'smem constant byte address 0x4 - core index']
  #allocation1 [shape = 'u32[72,128]{1,0:T(1,128)}', space=vmem, size = 0x9000, scoped, tag = 'internal scratch']
  %s0 = inlined_call_operand.hbm [shape: f32[1,2048], index: 0, kind: input, shape index: {}]
  %s1 = inlined_call_operand.hbm [shape: f32[1,2048], index: 1, kind: output, shape index: {}]
  %s2 = sld [smem:[#allocation0]]
  $region18: #{tpu_custom_call.1} parent=0
    _
  %s4 = ssub.s32 1, %s2
  %s5 = scalar_select 0, %s4, %s2
  $region1: #{tpu_custom_call.1} parent=0
    #allocation2 [shape = 'u8[8192]{0}', space=vmem, size = 0x2000, scoped, tag = 'input window, operand 0, single buffered']
    #allocation3 [shape = 's32[1]{0}', space=sflag, size = 0x4, scoped, tag = 'scoped memory for tpu_custom_call.1']
    #allocation4 [shape = 's32[1]{0}', space=sflag, size = 0x4, scoped, tag = 'scoped memory for tpu_custom_call.1']
    #allocation5 [shape = 'u8[8192]{0}', space=vmem, size = 0x2000, scoped, tag = 'output window, operand 0, single buffered']
    %6 = vsyncpa [#allocation3], 0
    %7 = vsyncpa [#allocation4], 0
    // Predicated region
    $region2: #{tpu_custom_call.1} parent=1 // pred_check
      _
    $region3: #{tpu_custom_call.1} parent=1 // pred_check_branch
      %9 = sbr.rel (0) target = $region5
    $region4: #{tpu_custom_call.1} parent=1 // pred_region
      %11 = vsyncadd [#allocation3], 0
      %s13 = sshll.u32 %s0, 4
      %s14 = int_to_ptr.hbm [resolvable:$true] %s13
      %s15 = sshll.u32 [#allocation2], 4
      %s16 = int_to_ptr.vmem [resolvable:$true] %s15
      %18 = dma.hbm_to_vmem [thread:$0]  %s14, 256, %s16, [#allocation3]
    $region5: #{tpu_custom_call.1} parent=1 // pred_fallthru
      _
    // Predicated region
    $region6: #{tpu_custom_call.1} parent=1 // pred_check
      _
    $region7: #{tpu_custom_call.1} parent=1 // pred_check_branch
      %20 = sbr.rel (0) target = $region9
    $region8: #{tpu_custom_call.1} parent=1 // pred_region
      %22 = dma.done [#allocation3], 256
    $region9: #{tpu_custom_call.1} parent=1 // pred_fallthru
      _
    %v23 = vld [vmem:[#allocation2] sm:$0xff]
    %v24 = vld [vmem:[#allocation2 + $0x8] sm:$0xff]
    %v25 = vmul.f32 %v23, 0.003921569
    %v26 = vmul.f32 %v24, 0.003921569
    %v27 = vsub.f32 %v25, 0.5
    %v28 = vsub.f32 %v26, 0.5
    %29 = vst [vmem:[#allocation5] sm:$0xff] %v27
    %30 = vst [vmem:[#allocation5 + $0x8] sm:$0xff] %v28
    // Predicated region
    $region10: #{tpu_custom_call.1} parent=1 // pred_check
      _
    $region11: #{tpu_custom_call.1} parent=1 // pred_check_branch
      %32 = sbr.rel (0) target = $region13
    $region12: #{tpu_custom_call.1} parent=1 // pred_region
      %34 = vsyncadd [#allocation4], 0
      %s36 = sshll.u32 [#allocation5], 4
      %s37 = int_to_ptr.vmem [resolvable:$true] %s36
      %s38 = sshll.u32 %s1, 4
      %s39 = int_to_ptr.hbm [resolvable:$true] %s38
      %41 = dma.vmem_to_hbm [thread:$0]  %s37, 256, %s39, [#allocation4]
    $region13: #{tpu_custom_call.1} parent=1 // pred_fallthru
      _
    // Predicated region
    $region14: #{tpu_custom_call.1} parent=1 // pred_check
      _
    $region15: #{tpu_custom_call.1} parent=1 // pred_check_branch
      %43 = sbr.rel (0) target = $region17
    $region16: #{tpu_custom_call.1} parent=1 // pred_region
      %45 = dma.done [#allocation4], 256
    $region17: #{tpu_custom_call.1} parent=1 // pred_fallthru
      _
    %46 = vsyncpa [#allocation3], 1
    %47 = vsyncpa [#allocation4], 1

</llo_original>
